<compile_context>
chip_gen: v6e
topology: v6e:2x2x1
jax: 0.10.0
libtpu: 0.0.40
codegen_flags: <defaults>
</compile_context>

<pallas_src>
import functools

import jax
import jax.numpy as jnp
from jax import lax
from jax.experimental import pallas as pl
from jax.experimental.pallas import tpu as pltpu

NEG_SLOPE = 0.2
MASK_VAL = -1e30   # finite mask sentinel; kept in f32 (never cast to bf16)


# ---------------------------------------------------------------------------
# Kernel 1: node projection (runs once per node tile).
#   Wh^T  = W @ h^T              -> (H*D, tile)  (feature-major, lane-dense N)
#   e_l   = Wh^T^T @ attn_l-bd   -> (tile, H)    (src logits, node-major)
#   e_r^T = attn_r-bd^T @ Wh^T   -> (H, tile)    (dst logits, lane-dense)
# ---------------------------------------------------------------------------
def gat_proj_kernel(h_ref, w_ref, al_ref, ar_ref, wht_ref, el_ref, ert_ref):
    # contract w_t's F_in axis with h's F_in axis -> transposed Wh directly,
    # no in-kernel transpose needed.
    wh_t = lax.dot_general(w_ref[...], h_ref[...], (((0,), (1,)), ((), ())),
                           preferred_element_type=jnp.float32)        # (HD, T)
    # e_l node-major: per-head (TS, 1) columns broadcast down the src sublane
    # axis of the (src, dst) e tiles without any transpose.
    el_ref[...] = lax.dot_general(wh_t, al_ref[...], (((0,), (0,)), ((), ())),
                                  preferred_element_type=jnp.float32)  # (T, H)
    # e_r head-major: per-head (1, TD) rows broadcast along the dst lane axis.
    ert_ref[...] = lax.dot_general(ar_ref[...], wh_t, (((0,), (0,)), ((), ())),
                                   preferred_element_type=jnp.float32)  # (H, T)
    wht_ref[...] = wh_t.astype(wht_ref.dtype)


# ---------------------------------------------------------------------------
# Kernel 2: masked softmax over sources + aggregation (online softmax).
# grid = (dst_tiles, src_tiles); src is the reduction axis (last, "arbitrary").
# e / p tiles are (src, dst): src on sublanes, dst on lanes -> acc/out writes
# are full-vreg stores and the MXU result lanes span the node tile.
# ---------------------------------------------------------------------------
def gat_attn_kernel(cnt_ref, el_ref, ert_ref, wht_ref, adj_ref, bias_ref,
                    out_ref, m_sc, l_sc, acc_sc,
                    *, num_heads, out_feats, approx_recip):
    d = pl.program_id(0)
    s = pl.program_id(1)
    n_src = pl.num_programs(1)

    @pl.when(s == 0)
    def _init():
        m_sc[...] = jnp.full_like(m_sc, MASK_VAL)
        l_sc[...] = jnp.zeros_like(l_sc)
        acc_sc[...] = jnp.zeros_like(acc_sc)

    @pl.when(cnt_ref[d * n_src + s] > 0)     # skip adjacency tiles w/o edges
    def _update():
        # edge mask without int8->f32 unpack; additive mask bias built once
        # per (src, dst) tile and reused by every head (1 select + H adds).
        edge = adj_ref[...] != 0                       # (TS, TD) bool
        mbias = jnp.where(edge, 0.0, MASK_VAL)         # (TS, TD) f32
        el = el_ref[...]                               # (TS, H)   f32
        er_t = ert_ref[...]                            # (H, TD)   f32
        wh_t = wht_ref[...]                            # (H*D, TS) compute dtype
        for hh in range(num_heads):                    # small static head count
            hsl = slice(hh * out_feats, (hh + 1) * out_feats)
            # e[src, dst] = LeakyReLU(e_l[src] + e_r[dst]) + mask bias
            e = el[:, hh:hh + 1] + er_t[hh:hh + 1, :]             # (TS, TD)
            e = jnp.where(e > 0, e, NEG_SLOPE * e) + mbias
            # online softmax over the src (sublane) axis; masked entries
            # underflow to 0 relative to the real max; tiles seen before any
            # real edge are annihilated later by corr=0 (self-loops assumed).
            m_prev = m_sc[hh:hh + 1, :]                           # (1, TD)
            m_new = jnp.maximum(m_prev, jnp.max(e, axis=0, keepdims=True))
            corr = jnp.exp(m_prev - m_new)
            p = jnp.exp(e - m_new)                                # (TS, TD)
            l_sc[hh:hh + 1, :] = (corr * l_sc[hh:hh + 1, :]
                                  + jnp.sum(p, axis=0, keepdims=True))
            # (D, TS) @ (TS, TD) -> (D, TD): result lanes = node tile, and the
            # per-head acc slice is a full-vreg-aligned unmasked store.
            acc_sc[hsl, :] = corr * acc_sc[hsl, :] + jnp.dot(
                wh_t[hsl, :], p.astype(wh_t.dtype),
                preferred_element_type=jnp.float32)
            m_sc[hh:hh + 1, :] = m_new

    @pl.when(s == n_src - 1)
    def _finalize():
        inv = pl.reciprocal(l_sc[...], approx=approx_recip)       # (H, TD)
        bias = bias_ref[...]                                      # (H*D, 1)
        for hh in range(num_heads):
            hsl = slice(hh * out_feats, (hh + 1) * out_feats)
            out_ref[hsl, :] = (acc_sc[hsl, :] * inv[hh:hh + 1, :]
                               + bias[hsl, :]).astype(out_ref.dtype)


def gat_conv(h, adj, w_t, attn_l, attn_r, bias, *, num_heads, out_feats,
             compute_dtype=jnp.bfloat16, tile=512, approx_recip=True,
             adj_buffers=2, check_in_degree=True):
    """GATConv forward.

    h: (N, F_in) node features; adj: (N, N) with adj[i, j] != 0 iff edge i->j
    (src rows, dst cols, matching torch.sparse_coo layout); w_t: (F_in, H*D) =
    fc.weight.T; attn_l/attn_r: (H, D); bias: (H*D,).  Returns (N, H, D).

    compute_dtype: dtype fed to the MXU matmuls (bf16 on all TPU generations;
    softmax math / accumulators are always f32).
    tile: node tile for dst/src, multiple of 128.  <=512 keeps double-buffered
    int8 adj, Wh^T and the f32 e/p temporaries inside v7x's 64 MiB VMEM while
    leaving >=2 dst tiles for its 2 TensorCores; ~1024 is fine on v6e/v5e
    (128 MiB).  adj_buffers=3 deepens the adj/Wh pipeline (useful on v5e).
    """
    n, f_in = h.shape
    hd = num_heads * out_feats
    assert tile % 128 == 0, "node tile must be a multiple of 128 (lane width)"
    n_pad = ((n + tile - 1) // tile) * tile
    n_tiles = n_pad // tile
    itemsize = 2 if compute_dtype == jnp.bfloat16 else 4

    if check_in_degree:
        # Mirrors the module's 0-in-degree guard: the online-softmax "garbage
        # annihilated by corr=0" scheme requires every real dst node to have
        # at least one in-edge (e.g. self-loops).  Eager inputs only.
        try:
            has_zero = bool(jnp.any(jnp.sum(adj != 0, axis=0) == 0))
        except Exception:
            has_zero = False   # traced input: skip the eager check
        if has_zero:
            raise ValueError("0-in-degree nodes in graph; add self-loops or "
                             "pass check_in_degree=False.")

    # ---- trace-time glue (cheap, runs once) --------------------------------
    h_p = jnp.zeros((n_pad, f_in), compute_dtype).at[:n].set(
        h.astype(compute_dtype))
    w_p = w_t.astype(compute_dtype)
    # original-orientation int8 adjacency (src rows, dst cols) — no dense
    # transpose copy needed any more.
    adj_p = jnp.zeros((n_pad, n_pad), jnp.int8).at[:n, :n].set(
        (adj != 0).astype(jnp.int8))
    # flat 1D per-(dst_tile, src_tile) edge counts -> SMEM scalar prefetch,
    # indexed [d * n_src_tiles + s]; avoids 2D SMEM padding blow-up.
    # TODO(synk): for block-sparse graphs also skip the adj/Wh DMA of empty
    # tiles via a data-dependent index_map (remap to the previous block).
    counts = adj_p.astype(jnp.int32).reshape(
        n_tiles, tile, n_tiles, tile).sum(axis=(1, 3)).T.reshape(-1)
    # block-diagonal attention vectors so e_l / e_r are single MXU matmuls.
    al_bd = jnp.zeros((hd, num_heads), jnp.float32)
    ar_bd = jnp.zeros((hd, num_heads), jnp.float32)
    for hh in range(num_heads):
        al_bd = al_bd.at[hh * out_feats:(hh + 1) * out_feats, hh].set(
            attn_l[hh].astype(jnp.float32))
        ar_bd = ar_bd.at[hh * out_feats:(hh + 1) * out_feats, hh].set(
            attn_r[hh].astype(jnp.float32))
    bias2d = bias.reshape(hd, 1).astype(jnp.float32)

    # ---- kernel 1: projection + attention logits, once per node tile -------
    wh_t, el, er_t = pl.pallas_call(
        gat_proj_kernel,
        out_shape=(jax.ShapeDtypeStruct((hd, n_pad), compute_dtype),
                   jax.ShapeDtypeStruct((n_pad, num_heads), jnp.float32),
                   jax.ShapeDtypeStruct((num_heads, n_pad), jnp.float32)),
        grid_spec=pltpu.PrefetchScalarGridSpec(
            num_scalar_prefetch=0,
            grid=(n_tiles,),
            in_specs=[pl.BlockSpec((tile, f_in), lambda i: (i, 0)),
                      pl.BlockSpec((f_in, hd), lambda i: (0, 0)),
                      pl.BlockSpec((hd, num_heads), lambda i: (0, 0)),
                      pl.BlockSpec((hd, num_heads), lambda i: (0, 0))],
            out_specs=[pl.BlockSpec((hd, tile), lambda i: (0, i)),
                       pl.BlockSpec((tile, num_heads), lambda i: (i, 0)),
                       pl.BlockSpec((num_heads, tile), lambda i: (0, i))]),
        compiler_params=pltpu.CompilerParams(
            dimension_semantics=("parallel",)),
    )(h_p, w_p, al_bd, ar_bd)

    # ---- kernel 2: tiled masked softmax + aggregation ----------------------
    def _streamed(shape, idx):
        # optional deeper buffering for the two streamed operands (v5e).
        if adj_buffers > 2:
            return pl.BlockSpec(shape, idx,
                                pipeline_mode=pl.Buffered(adj_buffers))
        return pl.BlockSpec(shape, idx)

    # VMEM demand estimate (double-buffered operands/out + scratch + f32 e/p
    # temporaries).  Only raise the scoped limit when the tiles actually need
    # it; never blanket-request the whole 64 MiB of a v7x core.
    vmem_need = (2 * tile * tile                                  # adj int8 x2
                 + 2 * hd * tile * itemsize                       # Wh^T x2
                 + 2 * (tile + tile) * num_heads * 4              # el / er_t x2
                 + 2 * hd * tile * 4                              # out x2
                 + (hd + 2 * num_heads) * tile * 4                # acc/m/l
                 + 6 * tile * tile * 4)                           # e/p/mask tmp
    cp_kwargs = {}
    if vmem_need > 24 * 1024 * 1024:
        cp_kwargs["vmem_limit_bytes"] = min(
            int(1.5 * vmem_need) + (4 << 20), 100 * 1024 * 1024)

    kernel = functools.partial(
        gat_attn_kernel, num_heads=num_heads, out_feats=out_feats,
        approx_recip=approx_recip)
    out_t = pl.pallas_call(
        kernel,
        out_shape=jax.ShapeDtypeStruct((hd, n_pad), jnp.float32),
        grid_spec=pltpu.PrefetchScalarGridSpec(
            num_scalar_prefetch=1,            # flat counts -> SMEM
            grid=(n_tiles, n_tiles),          # (dst tiles, src tiles); src last
            in_specs=[
                pl.BlockSpec((tile, num_heads), lambda d, s, cnt: (s, 0)),  # el
                pl.BlockSpec((num_heads, tile), lambda d, s, cnt: (0, d)),  # er^T
                _streamed((hd, tile), lambda d, s, cnt: (0, s)),            # Wh^T
                _streamed((tile, tile), lambda d, s, cnt: (s, d)),          # adj i8
                pl.BlockSpec((hd, 1), lambda d, s, cnt: (0, 0)),            # bias
            ],
            out_specs=pl.BlockSpec((hd, tile), lambda d, s, cnt: (0, d)),
            scratch_shapes=[pltpu.VMEM((num_heads, tile), jnp.float32),     # m
                            pltpu.VMEM((num_heads, tile), jnp.float32),     # l
                            pltpu.VMEM((hd, tile), jnp.float32)]),          # acc
        compiler_params=pltpu.CompilerParams(
            dimension_semantics=("parallel", "arbitrary"), **cp_kwargs),
    )(counts, el, er_t, wh_t, adj_p, bias2d)

    # TODO(synk): residual / activation / edge_weight / get_attention paths of
    # the module are not implemented (all default-off in this configuration).
    return out_t[:, :n].T.reshape(n, num_heads, out_feats)


def gat_reference(h, adj, w_t, attn_l, attn_r, bias, *, num_heads, out_feats):
    """Pure-JAX reference mirroring the PyTorch forward."""
    n = h.shape[0]
    wh = jnp.dot(h, w_t)                            # (N, H*D)
    wh3 = wh.reshape(n, num_heads, out_feats)       # (N, H, D)
    el = jnp.sum(wh3 * attn_l[None], axis=-1)       # (N, H)
    er = jnp.sum(wh3 * attn_r[None], axis=-1)       # (N, H)
    e = el[:, None, :] + er[None, :, :]             # (src, dst, H)
    e = jnp.where(e > 0, e, NEG_SLOPE * e)
    mask = (adj > 0)[:, :, None]
    e = jnp.where(mask, e, -jnp.inf)
    alpha = jax.nn.softmax(e, axis=0)               # softmax over sources
    alpha = jnp.where(mask, alpha, 0.0)
    out = jnp.einsum('ijh,ihd->jhd', alpha, wh3)    # (dst, H, D)
    return out + bias.reshape(1, num_heads, out_feats)


if __name__ == "__main__":
    # Small shapes consistent with the module; N=200 with tile=128 pads to 256
    # so the (dst, src) grid is 2x2 and the online-softmax accumulation and
    # megacore-parallel dst axis are exercised; a clustered-adjacency case
    # exercises the empty-tile skip.  (Production default tile is 512.)
    N, IN_FEATS, OUT_FEATS, NUM_HEADS = 200, 32, 8, 4
    HD = NUM_HEADS * OUT_FEATS

    key = jax.random.PRNGKey(0)
    k_h, k_w, k_al, k_ar, k_adj = jax.random.split(key, 5)

    # Deterministic "xavier-normal-like" params (gain=sqrt(2)), bias init to 0
    gain = jnp.sqrt(2.0)
    w_std = gain * jnp.sqrt(2.0 / (IN_FEATS + HD))
    a_std = gain * jnp.sqrt(2.0 / (NUM_HEADS * OUT_FEATS + 1))
    w_t = w_std * jax.random.normal(k_w, (IN_FEATS, HD), jnp.float32)   # fc.weight.T
    attn_l = a_std * jax.random.normal(k_al, (NUM_HEADS, OUT_FEATS), jnp.float32)
    attn_r = a_std * jax.random.normal(k_ar, (NUM_HEADS, OUT_FEATS), jnp.float32)
    bias = jnp.zeros((HD,), jnp.float32)

    # Node features and a sparse random adjacency with self-loops
    # (no 0-in-degree nodes, as required by the module's default check).
    h = jax.random.normal(k_h, (N, IN_FEATS), jnp.float32)
    adj = (jax.random.uniform(k_adj, (N, N)) < 0.05).astype(jnp.float32)
    adj = jnp.maximum(adj, jnp.eye(N, dtype=jnp.float32))

    ref = gat_reference(h, adj, w_t, attn_l, attn_r, bias,
                        num_heads=NUM_HEADS, out_feats=OUT_FEATS)

    # 1) f32 / exact-reciprocal path: tight correctness check, 2x2 grid.
    out = gat_conv(h, adj, w_t, attn_l, attn_r, bias,
                   num_heads=NUM_HEADS, out_feats=OUT_FEATS,
                   compute_dtype=jnp.float32, tile=128, approx_recip=False)
    out = jax.block_until_ready(out)
    assert out.shape == (N, NUM_HEADS, OUT_FEATS)
    assert jnp.allclose(out, ref, atol=5e-4, rtol=5e-4), "f32 mismatch vs reference"

    # 2) bf16-MXU + approx-reciprocal path (the fast configuration on
    #    v5e/v6e/v7x), single 256-tile.  Compared against a reference with the
    #    same bf16 rounding on the projection inputs; the remaining delta is
    #    the bf16 Wh / p fed to the aggregation matmul + approx 1/l.
    out_bf = gat_conv(h, adj, w_t, attn_l, attn_r, bias,
                      num_heads=NUM_HEADS, out_feats=OUT_FEATS,
                      compute_dtype=jnp.bfloat16, tile=256)
    out_bf = jax.block_until_ready(out_bf)
    ref_bf = gat_reference(h.astype(jnp.bfloat16).astype(jnp.float32), adj,
                           w_t.astype(jnp.bfloat16).astype(jnp.float32),
                           attn_l, attn_r, bias,
                           num_heads=NUM_HEADS, out_feats=OUT_FEATS)
    assert jnp.allclose(out_bf, ref_bf, atol=1e-1, rtol=1e-1), "bf16 mismatch"

    # 3) clustered adjacency (edges only among the first 64 nodes plus
    #    self-loops everywhere): off-diagonal (dst, src) tiles have zero edge
    #    counts, exercising the scalar-prefetched empty-tile skip.
    adj_c = jnp.zeros((N, N), jnp.float32).at[:64, :64].set(adj[:64, :64])
    adj_c = jnp.maximum(adj_c, jnp.eye(N, dtype=jnp.float32))
    out_c = gat_conv(h, adj_c, w_t, attn_l, attn_r, bias,
                     num_heads=NUM_HEADS, out_feats=OUT_FEATS,
                     compute_dtype=jnp.float32, tile=128)
    out_c = jax.block_until_ready(out_c)
    ref_c = gat_reference(h, adj_c, w_t, attn_l, attn_r, bias,
                          num_heads=NUM_HEADS, out_feats=OUT_FEATS)
    assert jnp.allclose(out_c, ref_c, atol=2e-2, rtol=2e-2), "skip-path mismatch"

    print("KERNEL_OK")
</pallas_src>

<mosaic_0001>
module attributes {stable_mosaic.version = 11 : i64} {
  func.func @gat_proj_kernel(%arg0: i32, %arg1: memref<128x32xf32, #tpu.memory_space<vmem>>, %arg2: memref<32x32xf32, #tpu.memory_space<vmem>>, %arg3: memref<32x4xf32, #tpu.memory_space<vmem>>, %arg4: memref<32x4xf32, #tpu.memory_space<vmem>>, %arg5: memref<32x128xf32, #tpu.memory_space<vmem>>, %arg6: memref<128x4xf32, #tpu.memory_space<vmem>>, %arg7: memref<4x128xf32, #tpu.memory_space<vmem>>) attributes {dimension_semantics = [#tpu.dimension_semantics<parallel>], iteration_bounds = array<i64: 2>, scalar_prefetch = 0 : i64, scratch_operands = 0 : i64, tpu.core_type = #tpu.core_type<tc>, window_params = [{transform_indices = @transform_0, window_bounds = array<i64: 128, 32>}, {pipeline_mode = #tpu.pipeline_mode<synchronous>, transform_indices = @transform_1, window_bounds = array<i64: 32, 32>}, {pipeline_mode = #tpu.pipeline_mode<synchronous>, transform_indices = @transform_2, window_bounds = array<i64: 32, 4>}, {pipeline_mode = #tpu.pipeline_mode<synchronous>, transform_indices = @transform_3, window_bounds = array<i64: 32, 4>}, {transform_indices = @transform_4, window_bounds = array<i64: 32, 128>}, {transform_indices = @transform_5, window_bounds = array<i64: 128, 4>}, {transform_indices = @transform_6, window_bounds = array<i64: 4, 128>}]} {
    %c0 = arith.constant 0 : index
    %c0_0 = arith.constant 0 : index
    %0 = vector.load %arg2[%c0, %c0_0] : memref<32x32xf32, #tpu.memory_space<vmem>>, vector<32x32xf32>
    %c0_1 = arith.constant 0 : index
    %c0_2 = arith.constant 0 : index
    %1 = vector.load %arg1[%c0_1, %c0_2] : memref<128x32xf32, #tpu.memory_space<vmem>>, vector<128x32xf32>
    %cst = arith.constant dense<0.000000e+00> : vector<32x128xf32>
    %2 = tpu.matmul %0, %1, %cst {dimension_numbers = #tpu.dot_dimension_numbers<[0], [1], [1], [0], [0, 1, 1, 0], [], []>} : vector<32x32xf32>, vector<128x32xf32>, vector<32x128xf32> -> vector<32x128xf32>
    %c0_3 = arith.constant 0 : index
    %c0_4 = arith.constant 0 : index
    %3 = vector.load %arg3[%c0_3, %c0_4] : memref<32x4xf32, #tpu.memory_space<vmem>>, vector<32x4xf32>
    %cst_5 = arith.constant dense<0.000000e+00> : vector<128x4xf32>
    %4 = tpu.matmul %2, %3, %cst_5 {dimension_numbers = #tpu.dot_dimension_numbers<[0], [0], [1], [1], [0, 1, 1, 1], [], []>} : vector<32x128xf32>, vector<32x4xf32>, vector<128x4xf32> -> vector<128x4xf32>
    %c0_6 = arith.constant 0 : index
    %c0_7 = arith.constant 0 : index
    %5 = vector.load %arg6[%c0_6, %c0_7] : memref<128x4xf32, #tpu.memory_space<vmem>>, vector<128x4xf32>
    tpu.vector_store %arg6[%c0_6, %c0_7], %4 {strides = array<i32>} : memref<128x4xf32, #tpu.memory_space<vmem>>, vector<128x4xf32>,
    %c0_8 = arith.constant 0 : index
    %c0_9 = arith.constant 0 : index
    %6 = vector.load %arg4[%c0_8, %c0_9] : memref<32x4xf32, #tpu.memory_space<vmem>>, vector<32x4xf32>
    %cst_10 = arith.constant dense<0.000000e+00> : vector<4x128xf32>
    %7 = tpu.matmul %6, %2, %cst_10 {dimension_numbers = #tpu.dot_dimension_numbers<[0], [0], [1], [1], [0, 1, 1, 1], [], []>} : vector<32x4xf32>, vector<32x128xf32>, vector<4x128xf32> -> vector<4x128xf32>
    %c0_11 = arith.constant 0 : index
    %c0_12 = arith.constant 0 : index
    %8 = vector.load %arg7[%c0_11, %c0_12] : memref<4x128xf32, #tpu.memory_space<vmem>>, vector<4x128xf32>
    tpu.vector_store %arg7[%c0_11, %c0_12], %7 {strides = array<i32>} : memref<4x128xf32, #tpu.memory_space<vmem>>, vector<4x128xf32>,
    %c0_13 = arith.constant 0 : index
    %c0_14 = arith.constant 0 : index
    %9 = vector.load %arg5[%c0_13, %c0_14] : memref<32x128xf32, #tpu.memory_space<vmem>>, vector<32x128xf32>
    tpu.vector_store %arg5[%c0_13, %c0_14], %2 {strides = array<i32>} : memref<32x128xf32, #tpu.memory_space<vmem>>, vector<32x128xf32>,
    return
  }
  func.func @transform_0(%arg0: i32) -> (i32, i32) {
    %c0_i32 = arith.constant 0 : i32
    %c0_i32_0 = arith.constant 0 : i32
    return %arg0, %c0_i32 : i32, i32
  }
  func.func @transform_1(%arg0: i32) -> (i32, i32) {
    %c0_i32 = arith.constant 0 : i32
    %c0_i32_0 = arith.constant 0 : i32
    %c0_i32_1 = arith.constant 0 : i32
    return %c0_i32, %c0_i32_0 : i32, i32
  }
  func.func @transform_2(%arg0: i32) -> (i32, i32) {
    %c0_i32 = arith.constant 0 : i32
    %c0_i32_0 = arith.constant 0 : i32
    %c0_i32_1 = arith.constant 0 : i32
    return %c0_i32, %c0_i32_0 : i32, i32
  }
  func.func @transform_3(%arg0: i32) -> (i32, i32) {
    %c0_i32 = arith.constant 0 : i32
    %c0_i32_0 = arith.constant 0 : i32
    %c0_i32_1 = arith.constant 0 : i32
    return %c0_i32, %c0_i32_0 : i32, i32
  }
  func.func @transform_4(%arg0: i32) -> (i32, i32) {
    %c0_i32 = arith.constant 0 : i32
    %c0_i32_0 = arith.constant 0 : i32
    return %c0_i32, %arg0 : i32, i32
  }
  func.func @transform_5(%arg0: i32) -> (i32, i32) {
    %c0_i32 = arith.constant 0 : i32
    %c0_i32_0 = arith.constant 0 : i32
    return %arg0, %c0_i32 : i32, i32
  }
  func.func @transform_6(%arg0: i32) -> (i32, i32) {
    %c0_i32 = arith.constant 0 : i32
    %c0_i32_0 = arith.constant 0 : i32
    return %c0_i32, %arg0 : i32, i32
  }
}

</mosaic_0001>

<llo_original>
// kernel: tpu_custom_call.1
$region0: #{tpu_custom_call.1}
  #allocation0 [shape = 'u32[]', space=smem, size = 0x4, offset = 0x4, fixed_abs, tag = 'smem constant byte address 0x4 - core index']
  #allocation1 [shape = 'u32[144,128]{1,0:T(1,128)}', space=vmem, size = 0x12000, scoped, tag = 'internal scratch']
  %s0 = inlined_call_operand.vmem [shape: f32[256,32], index: 0, kind: input, shape index: {}]
  %s1 = inlined_call_operand.vmem [shape: f32[32,32], index: 1, kind: input, shape index: {}]
  %s2 = inlined_call_operand.vmem [shape: f32[32,4], index: 2, kind: input, shape index: {}]
  %s3 = inlined_call_operand.vmem [shape: f32[32,4], index: 3, kind: input, shape index: {}]
  %s4 = inlined_call_operand.hbm [shape: f32[32,256], index: 4, kind: output, shape index: {0}]
  %s5 = inlined_call_operand.vmem [shape: f32[256,4], index: 5, kind: output, shape index: {1}]
  %s6 = inlined_call_operand.hbm [shape: f32[4,256], index: 6, kind: output, shape index: {2}]
  %7 = xla_tuple %s4, %s5, %s6
  %s8 = sld [smem:[#allocation0]]
  $region65: #{tpu_custom_call.1} parent=0
    _
  %s10 = ssub.s32 1, %s8
  %s11 = scalar_select 0, %s10, %s8
  $region1: #{tpu_custom_call.1} parent=0
    #allocation2 [shape = 'u8[32768]{0}', space=vmem, size = 0x8000, scoped, tag = 'output window, operand 0']
    #allocation3 [shape = 's32[2]{0}', space=sflag, size = 0x8, scoped, tag = 'scoped memory for tpu_custom_call.1']
    #allocation4 [shape = 'u8[4096]{0}', space=vmem, size = 0x1000, scoped, tag = 'output window, operand 2']
    #allocation5 [shape = 's32[2]{0}', space=sflag, size = 0x8, scoped, tag = 'scoped memory for tpu_custom_call.1']
    %12 = vsyncpa [#allocation3], 0
    %s13 = scalar_lea.sflag [#allocation3], 1
    %14 = vsyncpa %s13, 0
    %15 = vsyncpa [#allocation5], 0
    %s16 = scalar_lea.sflag [#allocation5], 1
    %17 = vsyncpa %s16, 0
    loop: start=0, step=1, limit=4
    $region2: #{tpu_custom_call.1} parent=1 // loop_pre_header
      _
    $region3: #{tpu_custom_call.1} parent=1 // loop_header
      %s19 = sphi 0, %s23
      %p20 = scmp.ge.s32.totalorder %s19, 4
      %s29 = sphi 0, %s31
      %s32 = sphi 0, %s29
      %s33 = sphi 0, %s32
      %s49 = sphi 0, %s33
      %s53 = sphi 0, %s53
      %s55 = sphi 0, %s53
      %s56 = sphi 0, %s55
      %s70 = sphi 0, %s56
      %s74 = sphi 0, %s74
      %s76 = sphi 0, %s74
      %s77 = sphi 0, %s76
      %s91 = sphi 0, %s77
      %s95 = sphi 0, %s95
      %s97 = sphi 0, %s95
      %s98 = sphi 0, %s97
      %s112 = sphi 0, %s98
      %s118 = sphi 0, %s120
      %s121 = sphi 0, %s118
      %s122 = sphi 0, %s121
      %s138 = sphi 0, %s122
      %s144 = sphi 0, %s146
      %s147 = sphi 0, %s144
      %s148 = sphi 0, %s147
      %s164 = sphi 0, %s148
      %s170 = sphi 0, %s172
      %s173 = sphi 0, %s170
      %s174 = sphi 0, %s173
      %s190 = sphi 0, %s174
    $region4: #{tpu_custom_call.1} parent=1 // loop_header_branch
      %22 = sbr.rel (%p20) target = $region8
    $region5: #{tpu_custom_call.1} parent=1 // loop_body
      %s24 = ssub.s32 %s19, 1
      %s25 = ssub.s32 %s19, 2
      %s26 = sadd.s32 %s19, 1
      %s27 = ssub.s32 %s19, %s26
      %p28 = scmp.eq.s32.totalorder %s27, 0
      %s30 = sadd.s32 %s29, 1
      %s31 = scalar_select %p28, %s29, %s30
      %p34 = pneg %p28
      %p35 = scmp.eq.s32.totalorder %s19, 1
      %p36 = por %p34, %p35
      %p37 = scmp.ne.s32.totalorder %s29, %s32
      %p38 = scmp.eq.s32.totalorder %s19, 0
      %p39 = por %p37, %p38
      %p40 = scmp.ne.s32.totalorder %s29, %s32
      %p41 = scmp.eq.s32.totalorder %s24, 1
      %p42 = por %p40, %p41
      %p43 = scmp.ne.s32.totalorder %s32, %s33
      %p44 = scmp.eq.s32.totalorder %s24, 0
      %p45 = por %p43, %p44
      %p46 = scmp.ne.s32.totalorder %s32, %s33
      %p47 = scmp.eq.s32.totalorder %s25, 1
      %p48 = por %p46, %p47
      %p50 = scmp.ne.s32.totalorder %s33, %s49
      %p51 = scmp.eq.s32.totalorder %s25, 0
      %p52 = por %p50, %p51
      %s54 = sadd.s32 %s53, 1
      %p57 = scmp.eq.s32.totalorder %s19, 1
      %p58 = scmp.ne.s32.totalorder %s53, %s55
      %p59 = scmp.eq.s32.totalorder %s19, 0
      %p60 = por %p58, %p59
      %p61 = scmp.ne.s32.totalorder %s53, %s55
      %p62 = scmp.eq.s32.totalorder %s24, 1
      %p63 = por %p61, %p62
      %p64 = scmp.ne.s32.totalorder %s55, %s56
      %p65 = scmp.eq.s32.totalorder %s24, 0
      %p66 = por %p64, %p65
      %p67 = scmp.ne.s32.totalorder %s55, %s56
      %p68 = scmp.eq.s32.totalorder %s25, 1
      %p69 = por %p67, %p68
      %p71 = scmp.ne.s32.totalorder %s56, %s70
      %p72 = scmp.eq.s32.totalorder %s25, 0
      %p73 = por %p71, %p72
      %s75 = sadd.s32 %s74, 1
      %p78 = scmp.eq.s32.totalorder %s19, 1
      %p79 = scmp.ne.s32.totalorder %s74, %s76
      %p80 = scmp.eq.s32.totalorder %s19, 0
      %p81 = por %p79, %p80
      %p82 = scmp.ne.s32.totalorder %s74, %s76
      %p83 = scmp.eq.s32.totalorder %s24, 1
      %p84 = por %p82, %p83
      %p85 = scmp.ne.s32.totalorder %s76, %s77
      %p86 = scmp.eq.s32.totalorder %s24, 0
      %p87 = por %p85, %p86
      %p88 = scmp.ne.s32.totalorder %s76, %s77
      %p89 = scmp.eq.s32.totalorder %s25, 1
      %p90 = por %p88, %p89
      %p92 = scmp.ne.s32.totalorder %s77, %s91
      %p93 = scmp.eq.s32.totalorder %s25, 0
      %p94 = por %p92, %p93
      %s96 = sadd.s32 %s95, 1
      %p99 = scmp.eq.s32.totalorder %s19, 1
      %p100 = scmp.ne.s32.totalorder %s95, %s97
      %p101 = scmp.eq.s32.totalorder %s19, 0
      %p102 = por %p100, %p101
      %p103 = scmp.ne.s32.totalorder %s95, %s97
      %p104 = scmp.eq.s32.totalorder %s24, 1
      %p105 = por %p103, %p104
      %p106 = scmp.ne.s32.totalorder %s97, %s98
      %p107 = scmp.eq.s32.totalorder %s24, 0
      %p108 = por %p106, %p107
      %p109 = scmp.ne.s32.totalorder %s97, %s98
      %p110 = scmp.eq.s32.totalorder %s25, 1
      %p111 = por %p109, %p110
      %p113 = scmp.ne.s32.totalorder %s98, %s112
      %p114 = scmp.eq.s32.totalorder %s25, 0
      %p115 = por %p113, %p114
      %s116 = ssub.s32 %s19, %s26
      %p117 = scmp.eq.s32.totalorder %s116, 0
      %s119 = sadd.s32 %s118, 1
      %s120 = scalar_select %p117, %s118, %s119
      %p123 = pneg %p117
      %p124 = scmp.eq.s32.totalorder %s19, 1
      %p125 = por %p123, %p124
      %p126 = scmp.ne.s32.totalorder %s118, %s121
      %p127 = scmp.eq.s32.totalorder %s19, 0
      %p128 = por %p126, %p127
      %p129 = scmp.ne.s32.totalorder %s118, %s121
      %p130 = scmp.eq.s32.totalorder %s24, 1
      %p131 = por %p129, %p130
      %p132 = scmp.ne.s32.totalorder %s121, %s122
      %p133 = scmp.eq.s32.totalorder %s24, 0
      %p134 = por %p132, %p133
      %p135 = scmp.ne.s32.totalorder %s121, %s122
      %p136 = scmp.eq.s32.totalorder %s25, 1
      %p137 = por %p135, %p136
      %p139 = scmp.ne.s32.totalorder %s122, %s138
      %p140 = scmp.eq.s32.totalorder %s25, 0
      %p141 = por %p139, %p140
      %s142 = ssub.s32 %s19, %s26
      %p143 = scmp.eq.s32.totalorder %s142, 0
      %s145 = sadd.s32 %s144, 1
      %s146 = scalar_select %p143, %s144, %s145
      %p149 = pneg %p143
      %p150 = scmp.eq.s32.totalorder %s19, 1
      %p151 = por %p149, %p150
      %p152 = scmp.ne.s32.totalorder %s144, %s147
      %p153 = scmp.eq.s32.totalorder %s19, 0
      %p154 = por %p152, %p153
      %p155 = scmp.ne.s32.totalorder %s144, %s147
      %p156 = scmp.eq.s32.totalorder %s24, 1
      %p157 = por %p155, %p156
      %p158 = scmp.ne.s32.totalorder %s147, %s148
      %p159 = scmp.eq.s32.totalorder %s24, 0
      %p160 = por %p158, %p159
      %p161 = scmp.ne.s32.totalorder %s147, %s148
      %p162 = scmp.eq.s32.totalorder %s25, 1
      %p163 = por %p161, %p162
      %p165 = scmp.ne.s32.totalorder %s148, %s164
      %p166 = scmp.eq.s32.totalorder %s25, 0
      %p167 = por %p165, %p166
      %s168 = ssub.s32 %s19, %s26
      %p169 = scmp.eq.s32.totalorder %s168, 0
      %s171 = sadd.s32 %s170, 1
      %s172 = scalar_select %p169, %s170, %s171
      %p175 = pneg %p169
      %p176 = scmp.eq.s32.totalorder %s19, 1
      %p177 = por %p175, %p176
      %p178 = scmp.ne.s32.totalorder %s170, %s173
      %p179 = scmp.eq.s32.totalorder %s19, 0
      %p180 = por %p178, %p179
      %p181 = scmp.ne.s32.totalorder %s170, %s173
      %p182 = scmp.eq.s32.totalorder %s24, 1
      %p183 = por %p181, %p182
      %p184 = scmp.ne.s32.totalorder %s173, %s174
      %p185 = scmp.eq.s32.totalorder %s24, 0
      %p186 = por %p184, %p185
      %p187 = scmp.ne.s32.totalorder %s173, %s174
      %p188 = scmp.eq.s32.totalorder %s25, 1
      %p189 = por %p187, %p188
      %p191 = scmp.ne.s32.totalorder %s174, %s190
      %p192 = scmp.eq.s32.totalorder %s25, 0
      %p193 = por %p191, %p192
      %p194 = scmp.le.s32.totalorder 1, %s19
      %p195 = scmp.lt.s32.totalorder %s19, 3
      %p196 = pnand %p194, %p195
      %p197 = pneg %p196
      // Predicated region
      $region9: #{tpu_custom_call.1} parent=5 // pred_check
        _
      $region10: #{tpu_custom_call.1} parent=5 // pred_check_branch
        %199 = sbr.rel (%p196) target = $region12
      $region11: #{tpu_custom_call.1} parent=5 // pred_region
        %s200 = ssub.s32 %s19, 1
        // Predicated region
        $region13: #{tpu_custom_call.1} parent=11 // pred_check
          %p201 = pneg %p66
        $region14: #{tpu_custom_call.1} parent=11 // pred_check_branch
          %203 = sbr.rel (%p201) target = $region16
        $region15: #{tpu_custom_call.1} parent=11 // pred_region
          _
        $region16: #{tpu_custom_call.1} parent=11 // pred_fallthru
          _
        // Predicated region
        $region17: #{tpu_custom_call.1} parent=11 // pred_check
          %p204 = pneg %p87
        $region18: #{tpu_custom_call.1} parent=11 // pred_check_branch
          %206 = sbr.rel (%p204) target = $region20
        $region19: #{tpu_custom_call.1} parent=11 // pred_region
          _
        $region20: #{tpu_custom_call.1} parent=11 // pred_fallthru
          _
        // Predicated region
        $region21: #{tpu_custom_call.1} parent=11 // pred_check
          %p207 = pneg %p108
        $region22: #{tpu_custom_call.1} parent=11 // pred_check_branch
          %209 = sbr.rel (%p207) target = $region24
        $region23: #{tpu_custom_call.1} parent=11 // pred_region
          _
        $region24: #{tpu_custom_call.1} parent=11 // pred_fallthru
          _
      $region12: #{tpu_custom_call.1} parent=5 // pred_fallthru
        _
      %p210 = scmp.lt.s32.totalorder %s19, 2
      // Predicated region
      $region25: #{tpu_custom_call.1} parent=5 // pred_check
        %p211 = pneg %p210
      $region26: #{tpu_custom_call.1} parent=5 // pred_check_branch
        %213 = sbr.rel (%p211) target = $region28
      $region27: #{tpu_custom_call.1} parent=5 // pred_region
        // Predicated region
        $region29: #{tpu_custom_call.1} parent=27 // pred_check
          %p214 = pneg %p39
        $region30: #{tpu_custom_call.1} parent=27 // pred_check_branch
          %216 = sbr.rel (%p214) target = $region32
        $region31: #{tpu_custom_call.1} parent=27 // pred_region
          %s217 = smul.u32 16, %s19
          %p218 = scmp.lt.s32.totalorder %s217, 31
          %s219 = scalar_select %p218, %s217, 31
          %s220 = smul.addr %s219, 8
          %s221 = scalar_lea.vmem %s0, %s220
          %s222 = smul.u32 16, %s19
        $region32: #{tpu_custom_call.1} parent=27 // pred_fallthru
          _
      $region28: #{tpu_custom_call.1} parent=5 // pred_fallthru
        _
      %p223 = scmp.le.s32.totalorder 1, %s19
      %p224 = scmp.lt.s32.totalorder %s19, 3
      %p225 = pnand %p223, %p224
      %p226 = pneg %p225
      // Predicated region
      $region33: #{tpu_custom_call.1} parent=5 // pred_check
        _
      $region34: #{tpu_custom_call.1} parent=5 // pred_check_branch
        %228 = sbr.rel (%p225) target = $region36
      $region35: #{tpu_custom_call.1} parent=5 // pred_region
        %s229 = ssub.s32 %s19, 1
        %s230 = smul.u32 16, %s24
        %p231 = scmp.lt.s32.totalorder %s230, 31
        %s232 = scalar_select %p231, %s230, 31
        %s233 = smul.addr %s232, 8
        %s234 = scalar_lea.vmem %s0, %s233
        %p235 = pneg %p45
        %p236 = pneg %p42
        %p237 = pneg %p66
        %p238 = pneg %p63
        %p239 = pneg %p87
        %p240 = pneg %p84
        %p241 = pneg %p108
        %p242 = pneg %p105
        %p243 = pneg %p134
        %p244 = pneg %p131
        %s245 = sand.u32 %s121, 1
        %s246 = scalar_lea.sflag [#allocation3], %s245
        %s247 = sand.u32 %s121, 1
        %s248 = smul.addr %s247, 32
        %s249 = scalar_lea.vmem [#allocation2], %s248
        %p250 = pneg %p160
        %p251 = pneg %p157
        %s252 = smul.u32 16, %s24
        %p253 = scmp.lt.s32.totalorder %s252, 31
        %s254 = scalar_select %p253, %s252, 31
        %s255 = smul.addr %s254, 8
        %s256 = scalar_lea.vmem %s5, %s255
        %p257 = pneg %p186
        %p258 = pneg %p183
        %s259 = sand.u32 %s173, 1
        %s260 = scalar_lea.sflag [#allocation5], %s259
        %s261 = sand.u32 %s173, 1
        %s262 = smul.addr %s261, 4
        %s263 = scalar_lea.vmem [#allocation4], %s262
        %s264 = smul.u32 16, %s24
        %p265 = scmp.lt.s32.totalorder %s264, 31
        %s266 = scalar_select %p265, %s264, 31
        %s267 = smul.addr %s266, 8
        %s268 = scalar_lea.vmem %s0, %s267
        %s269 = smul.u32 16, %s24
        %s270 = smul.u32 16, %s24
        %p271 = scmp.lt.s32.totalorder %s270, 31
        %s272 = scalar_select %p271, %s270, 31
        %s273 = smul.addr %s272, 8
        %s274 = scalar_lea.vmem %s5, %s273
        %s275 = smul.u32 16, %s24
        %v276 = vld [vmem:[%s1] sm:$0xff]
        %v277 = vld [vmem:[%s1 + $0x8] sm:$0xff]
        %v278 = vld [vmem:[%s1 + $0x10] sm:$0xff]
        %v279 = vld [vmem:[%s1 + $0x18] sm:$0xff]
        %v280 = vld [vmem:[%s268] sm:$0xff]
        %v281 = vld [vmem:[%s268 + $0x8] sm:$0xff]
        %v282 = vld [vmem:[%s268 + $0x10] sm:$0xff]
        %v283 = vld [vmem:[%s268 + $0x18] sm:$0xff]
        %v284 = vld [vmem:[%s268 + $0x20] sm:$0xff]
        %v285 = vld [vmem:[%s268 + $0x28] sm:$0xff]
        %v286 = vld [vmem:[%s268 + $0x30] sm:$0xff]
        %v287 = vld [vmem:[%s268 + $0x38] sm:$0xff]
        %v288 = vld [vmem:[%s268 + $0x40] sm:$0xff]
        %v289 = vld [vmem:[%s268 + $0x48] sm:$0xff]
        %v290 = vld [vmem:[%s268 + $0x50] sm:$0xff]
        %v291 = vld [vmem:[%s268 + $0x58] sm:$0xff]
        %v292 = vld [vmem:[%s268 + $0x60] sm:$0xff]
        %v293 = vld [vmem:[%s268 + $0x68] sm:$0xff]
        %v294 = vld [vmem:[%s268 + $0x70] sm:$0xff]
        %v295 = vld [vmem:[%s268 + $0x78] sm:$0xff]
        %296 = vxpose.xlu0.b32.start [1/16] %v276, 128
        %297 = vxpose.xlu0.b32.cont [2/16] %v277, 128
        %298 = vxpose.xlu0.b32.cont [3/16] %v278, 128
        %299 = vxpose.xlu0.b32.cont [4/16] %v279, 128
        %300 = vxpose.xlu0.b32.cont [5/16] 0.0, 128
        %301 = vxpose.xlu0.b32.cont [6/16] 0.0, 128
        %302 = vxpose.xlu0.b32.cont [7/16] 0.0, 128
        %303 = vxpose.xlu0.b32.cont [8/16] 0.0, 128
        %304 = vxpose.xlu0.b32.cont [9/16] 0.0, 128
        %305 = vxpose.xlu0.b32.cont [10/16] 0.0, 128
        %306 = vxpose.xlu0.b32.cont [11/16] 0.0, 128
        %307 = vxpose.xlu0.b32.cont [12/16] 0.0, 128
        %308 = vxpose.xlu0.b32.cont [13/16] 0.0, 128
        %309 = vxpose.xlu0.b32.cont [14/16] 0.0, 128
        %310 = vxpose.xlu0.b32.cont [15/16] 0.0, 128
        %311 = vxpose.xlu0.b32.end [16/16] 0.0, 128
        %v312 = vpop.trf.xlu0
        %v313 = vpop.trf.xlu0
        %v314 = vpop.trf.xlu0
        %v315 = vpop.trf.xlu0
        %v316 = vpop.trf.xlu0
        %v317 = vpop.trf.xlu0
        %v318 = vpop.trf.xlu0
        %v319 = vpop.trf.xlu0
        %v320 = vpop.trf.xlu0
        %v321 = vpop.trf.xlu0
        %v322 = vpop.trf.xlu0
        %v323 = vpop.trf.xlu0
        %v324 = vpop.trf.xlu0
        %v325 = vpop.trf.xlu0
        %v326 = vpop.trf.xlu0
        %v327 = vpop.trf.xlu0
        %vm328 = vcmask 261120
        %v330 = vsel %vm328, %v312, 0
        %v333 = vsel %vm328, %v313, 0
        %v336 = vsel %vm328, %v314, 0
        %v339 = vsel %vm328, %v315, 0
        %v342 = vsel %vm328, %v280, 0
        %v345 = vsel %vm328, %v281, 0
        %v348 = vsel %vm328, %v282, 0
        %v351 = vsel %vm328, %v283, 0
        %v354 = vsel %vm328, %v284, 0
        %v357 = vsel %vm328, %v285, 0
        %v360 = vsel %vm328, %v286, 0
        %v363 = vsel %vm328, %v287, 0
        %v366 = vsel %vm328, %v288, 0
        %v369 = vsel %vm328, %v289, 0
        %v372 = vsel %vm328, %v290, 0
        %v375 = vsel %vm328, %v291, 0
        %v378 = vsel %vm328, %v292, 0
        %v381 = vsel %vm328, %v293, 0
        %v384 = vsel %vm328, %v294, 0
        %v387 = vsel %vm328, %v295, 0
        %389 = vmatprep.subr.mxu0 0.0
        %390 = vmatpush1.xpose.msra.mxu0 %v387
        %391 = vmatprep.subr.mxu0 0.0
        %392 = vmatpush1.xpose.msra.mxu0 %v384
        %393 = vmatprep.subr.mxu0 0.0
        %394 = vmatpush1.xpose.msra.mxu0 %v381
        %395 = vmatprep.subr.mxu0 0.0
        %396 = vmatpush1.xpose.msra.mxu0 %v378
        %397 = vmatprep.subr.mxu0 0.0
        %398 = vmatpush1.xpose.msra.mxu0 %v375
        %399 = vmatprep.subr.mxu0 0.0
        %400 = vmatpush1.xpose.msra.mxu0 %v372
        %401 = vmatprep.subr.mxu0 0.0
        %402 = vmatpush1.xpose.msra.mxu0 %v369
        %403 = vmatprep.subr.mxu0 0.0
        %404 = vmatpush1.xpose.msra.mxu0 %v366
        %405 = vmatprep.subr.mxu0 0.0
        %406 = vmatpush1.xpose.msra.mxu0 %v363
        %407 = vmatprep.subr.mxu0 0.0
        %408 = vmatpush1.xpose.msra.mxu0 %v360
        %409 = vmatprep.subr.mxu0 0.0
        %410 = vmatpush1.xpose.msra.mxu0 %v357
        %411 = vmatprep.subr.mxu0 0.0
        %412 = vmatpush1.xpose.msra.mxu0 %v354
        %413 = vmatprep.subr.mxu0 0.0
        %414 = vmatpush1.xpose.msra.mxu0 %v351
        %415 = vmatprep.subr.mxu0 0.0
        %416 = vmatpush1.xpose.msra.mxu0 %v348
        %417 = vmatprep.subr.mxu0 0.0
        %418 = vmatpush1.xpose.msra.mxu0 %v345
        %419 = vmatprep.subr.mxu0 0.0
        %420 = vmatpush1.xpose.msra.mxu0 %v342
        %421 = vmatprep.subr.mxu0 0.0
        %422 = vmatpush2.xpose.msra.mxu0 0.0
        %423 = vmatprep.subr.mxu0 0.0
        %424 = vmatpush2.xpose.msra.mxu0 0.0
        %425 = vmatprep.subr.mxu0 0.0
        %426 = vmatpush2.xpose.msra.mxu0 0.0
        %427 = vmatprep.subr.mxu0 0.0
        %428 = vmatpush2.xpose.msra.mxu0 0.0
        %429 = vmatprep.subr.mxu0 0.0
        %430 = vmatpush2.xpose.msra.mxu0 0.0
        %431 = vmatprep.subr.mxu0 0.0
        %432 = vmatpush2.xpose.msra.mxu0 0.0
        %433 = vmatprep.subr.mxu0 0.0
        %434 = vmatpush2.xpose.msra.mxu0 0.0
        %435 = vmatprep.subr.mxu0 0.0
        %436 = vmatpush2.xpose.msra.mxu0 0.0
        %437 = vmatprep.subr.mxu0 0.0
        %438 = vmatpush2.xpose.msra.mxu0 0.0
        %439 = vmatprep.subr.mxu0 0.0
        %440 = vmatpush2.xpose.msra.mxu0 0.0
        %441 = vmatprep.subr.mxu0 0.0
        %442 = vmatpush2.xpose.msra.mxu0 0.0
        %443 = vmatprep.subr.mxu0 0.0
        %444 = vmatpush2.xpose.msra.mxu0 0.0
        %445 = vmatprep.subr.mxu0 0.0
        %446 = vmatpush2.xpose.msra.mxu0 0.0
        %447 = vmatprep.subr.mxu0 0.0
        %448 = vmatpush2.xpose.msra.mxu0 0.0
        %449 = vmatprep.subr.mxu0 0.0
        %450 = vmatpush2.xpose.msra.mxu0 0.0
        %451 = vmatprep.subr.mxu0 0.0
        %452 = vmatpush2.xpose.msra.mxu0 0.0
        %453 = vmatprep.mubr.f32.mxu0 0.0
        %454 = vmatmul.mubr.f32.gmra.mxu0 %v330
        %v455 = vpop.f32.mrf.mxu0
        %v456 = vadd.f32 0.0, %v455
        %v457 = vpop.f32.mrf.mxu0
        %458 = vmatprep.mubr.f32.mxu0 0.0
        %459 = vmatmul.mubr.f32.gmra.mxu0 %v333
        %v460 = vpop.f32.mrf.mxu0
        %v461 = vadd.f32 0.0, %v460
        %v462 = vpop.f32.mrf.mxu0
        %463 = vmatprep.mubr.f32.mxu0 0.0
        %464 = vmatmul.mubr.f32.gmra.mxu0 %v336
        %v465 = vpop.f32.mrf.mxu0
        %v466 = vadd.f32 0.0, %v465
        %v467 = vpop.f32.mrf.mxu0
        %468 = vmatprep.mubr.f32.mxu0 0.0
        %469 = vmatmul.mubr.f32.gmra.mxu0 %v339
        %v470 = vpop.f32.mrf.mxu0
        %v471 = vadd.f32 0.0, %v470
        %v472 = vpop.f32.mrf.mxu0
        %473 = vdwg.mxu0
        %v474 = vld [vmem:[%s2] sm:$0xff]
        %v475 = vld [vmem:[%s2 + $0x8] sm:$0xff]
        %v476 = vld [vmem:[%s2 + $0x10] sm:$0xff]
        %v477 = vld [vmem:[%s2 + $0x18] sm:$0xff]
        %478 = vxpose.xlu0.b32.start [1/16] %v456, 128
        %479 = vxpose.xlu0.b32.cont [2/16] %v461, 128
        %480 = vxpose.xlu0.b32.cont [3/16] %v466, 128
        %481 = vxpose.xlu0.b32.cont [4/16] %v471, 128
        %482 = vxpose.xlu0.b32.cont [5/16] 0.0, 128
        %483 = vxpose.xlu0.b32.cont [6/16] 0.0, 128
        %484 = vxpose.xlu0.b32.cont [7/16] 0.0, 128
        %485 = vxpose.xlu0.b32.cont [8/16] 0.0, 128
        %486 = vxpose.xlu0.b32.cont [9/16] 0.0, 128
        %487 = vxpose.xlu0.b32.cont [10/16] 0.0, 128
        %488 = vxpose.xlu0.b32.cont [11/16] 0.0, 128
        %489 = vxpose.xlu0.b32.cont [12/16] 0.0, 128
        %490 = vxpose.xlu0.b32.cont [13/16] 0.0, 128
        %491 = vxpose.xlu0.b32.cont [14/16] 0.0, 128
        %492 = vxpose.xlu0.b32.cont [15/16] 0.0, 128
        %493 = vxpose.xlu0.b32.end [16/16] 0.0, 128
        %v494 = vpop.trf.xlu0
        %v495 = vpop.trf.xlu0
        %v496 = vpop.trf.xlu0
        %v497 = vpop.trf.xlu0
        %v498 = vpop.trf.xlu0
        %v499 = vpop.trf.xlu0
        %v500 = vpop.trf.xlu0
        %v501 = vpop.trf.xlu0
        %v502 = vpop.trf.xlu0
        %v503 = vpop.trf.xlu0
        %v504 = vpop.trf.xlu0
        %v505 = vpop.trf.xlu0
        %v506 = vpop.trf.xlu0
        %v507 = vpop.trf.xlu0
        %v508 = vpop.trf.xlu0
        %v509 = vpop.trf.xlu0
        %v511 = vsel %vm328, %v494, 0
        %v514 = vsel %vm328, %v495, 0
        %v517 = vsel %vm328, %v496, 0
        %v520 = vsel %vm328, %v497, 0
        %v523 = vsel %vm328, %v498, 0
        %v526 = vsel %vm328, %v499, 0
        %v529 = vsel %vm328, %v500, 0
        %v532 = vsel %vm328, %v501, 0
        %v535 = vsel %vm328, %v502, 0
        %v538 = vsel %vm328, %v503, 0
        %v541 = vsel %vm328, %v504, 0
        %v544 = vsel %vm328, %v505, 0
        %v547 = vsel %vm328, %v506, 0
        %v550 = vsel %vm328, %v507, 0
        %v553 = vsel %vm328, %v508, 0
        %v556 = vsel %vm328, %v509, 0
        %558 = vmatprep.subr.mxu0 0.0
        %559 = vmatpush1.msra.mxu0 0.0
        %560 = vmatprep.subr.mxu0 0.0
        %561 = vmatpush1.msra.mxu0 0.0
        %562 = vmatprep.subr.mxu0 0.0
        %563 = vmatpush1.msra.mxu0 0.0
        %564 = vmatprep.subr.mxu0 0.0
        %565 = vmatpush1.msra.mxu0 0.0
        %566 = vmatprep.subr.mxu0 0.0
        %567 = vmatpush1.msra.mxu0 0.0
        %568 = vmatprep.subr.mxu0 0.0
        %569 = vmatpush1.msra.mxu0 0.0
        %570 = vmatprep.subr.mxu0 0.0
        %571 = vmatpush1.msra.mxu0 0.0
        %572 = vmatprep.subr.mxu0 0.0
        %573 = vmatpush1.msra.mxu0 0.0
        %574 = vmatprep.subr.mxu0 0.0
        %575 = vmatpush1.msra.mxu0 0.0
        %576 = vmatprep.subr.mxu0 0.0
        %577 = vmatpush1.msra.mxu0 0.0
        %578 = vmatprep.subr.mxu0 0.0
        %579 = vmatpush1.msra.mxu0 0.0
        %580 = vmatprep.subr.mxu0 0.0
        %581 = vmatpush1.msra.mxu0 0.0
        %582 = vmatprep.subr.mxu0 0.0
        %583 = vmatpush1.msra.mxu0 %v477
        %584 = vmatprep.subr.mxu0 0.0
        %585 = vmatpush1.msra.mxu0 %v476
        %586 = vmatprep.subr.mxu0 0.0
        %587 = vmatpush1.msra.mxu0 %v475
        %588 = vmatprep.subr.mxu0 0.0
        %589 = vmatpush1.msra.mxu0 %v474
        %590 = vmatprep.subr.mxu0 0.0
        %591 = vmatpush2.msra.mxu0 0.0
        %592 = vmatprep.subr.mxu0 0.0
        %593 = vmatpush2.msra.mxu0 0.0
        %594 = vmatprep.subr.mxu0 0.0
        %595 = vmatpush2.msra.mxu0 0.0
        %596 = vmatprep.subr.mxu0 0.0
        %597 = vmatpush2.msra.mxu0 0.0
        %598 = vmatprep.subr.mxu0 0.0
        %599 = vmatpush2.msra.mxu0 0.0
        %600 = vmatprep.subr.mxu0 0.0
        %601 = vmatpush2.msra.mxu0 0.0
        %602 = vmatprep.subr.mxu0 0.0
        %603 = vmatpush2.msra.mxu0 0.0
        %604 = vmatprep.subr.mxu0 0.0
        %605 = vmatpush2.msra.mxu0 0.0
        %606 = vmatprep.subr.mxu0 0.0
        %607 = vmatpush2.msra.mxu0 0.0
        %608 = vmatprep.subr.mxu0 0.0
        %609 = vmatpush2.msra.mxu0 0.0
        %610 = vmatprep.subr.mxu0 0.0
        %611 = vmatpush2.msra.mxu0 0.0
        %612 = vmatprep.subr.mxu0 0.0
        %613 = vmatpush2.msra.mxu0 0.0
        %614 = vmatprep.subr.mxu0 0.0
        %615 = vmatpush2.msra.mxu0 0.0
        %616 = vmatprep.subr.mxu0 0.0
        %617 = vmatpush2.msra.mxu0 0.0
        %618 = vmatprep.subr.mxu0 0.0
        %619 = vmatpush2.msra.mxu0 0.0
        %620 = vmatprep.subr.mxu0 0.0
        %621 = vmatpush2.msra.mxu0 0.0
        %622 = vmatprep.mubr.f32.mxu0 0.0
        %623 = vmatmul.mubr.f32.gmra.mxu0 %v511
        %v624 = vpop.f32.mrf.mxu0
        %v625 = vadd.f32 0.0, %v624
        %v626 = vpop.f32.mrf.mxu0
        %627 = vmatprep.mubr.f32.mxu0 0.0
        %628 = vmatmul.mubr.f32.gmra.mxu0 %v514
        %v629 = vpop.f32.mrf.mxu0
        %v630 = vadd.f32 0.0, %v629
        %v631 = vpop.f32.mrf.mxu0
        %632 = vmatprep.mubr.f32.mxu0 0.0
        %633 = vmatmul.mubr.f32.gmra.mxu0 %v517
        %v634 = vpop.f32.mrf.mxu0
        %v635 = vadd.f32 0.0, %v634
        %v636 = vpop.f32.mrf.mxu0
        %637 = vmatprep.mubr.f32.mxu0 0.0
        %638 = vmatmul.mubr.f32.gmra.mxu0 %v520
        %v639 = vpop.f32.mrf.mxu0
        %v640 = vadd.f32 0.0, %v639
        %v641 = vpop.f32.mrf.mxu0
        %642 = vmatprep.mubr.f32.mxu0 0.0
        %643 = vmatmul.mubr.f32.gmra.mxu0 %v523
        %v644 = vpop.f32.mrf.mxu0
        %v645 = vadd.f32 0.0, %v644
        %v646 = vpop.f32.mrf.mxu0
        %647 = vmatprep.mubr.f32.mxu0 0.0
        %648 = vmatmul.mubr.f32.gmra.mxu0 %v526
        %v649 = vpop.f32.mrf.mxu0
        %v650 = vadd.f32 0.0, %v649
        %v651 = vpop.f32.mrf.mxu0
        %652 = vmatprep.mubr.f32.mxu0 0.0
        %653 = vmatmul.mubr.f32.gmra.mxu0 %v529
        %v654 = vpop.f32.mrf.mxu0
        %v655 = vadd.f32 0.0, %v654
        %v656 = vpop.f32.mrf.mxu0
        %657 = vmatprep.mubr.f32.mxu0 0.0
        %658 = vmatmul.mubr.f32.gmra.mxu0 %v532
        %v659 = vpop.f32.mrf.mxu0
        %v660 = vadd.f32 0.0, %v659
        %v661 = vpop.f32.mrf.mxu0
        %662 = vmatprep.mubr.f32.mxu0 0.0
        %663 = vmatmul.mubr.f32.gmra.mxu0 %v535
        %v664 = vpop.f32.mrf.mxu0
        %v665 = vadd.f32 0.0, %v664
        %v666 = vpop.f32.mrf.mxu0
        %667 = vmatprep.mubr.f32.mxu0 0.0
        %668 = vmatmul.mubr.f32.gmra.mxu0 %v538
        %v669 = vpop.f32.mrf.mxu0
        %v670 = vadd.f32 0.0, %v669
        %v671 = vpop.f32.mrf.mxu0
        %672 = vmatprep.mubr.f32.mxu0 0.0
        %673 = vmatmul.mubr.f32.gmra.mxu0 %v541
        %v674 = vpop.f32.mrf.mxu0
        %v675 = vadd.f32 0.0, %v674
        %v676 = vpop.f32.mrf.mxu0
        %677 = vmatprep.mubr.f32.mxu0 0.0
        %678 = vmatmul.mubr.f32.gmra.mxu0 %v544
        %v679 = vpop.f32.mrf.mxu0
        %v680 = vadd.f32 0.0, %v679
        %v681 = vpop.f32.mrf.mxu0
        %682 = vmatprep.mubr.f32.mxu0 0.0
        %683 = vmatmul.mubr.f32.gmra.mxu0 %v547
        %v684 = vpop.f32.mrf.mxu0
        %v685 = vadd.f32 0.0, %v684
        %v686 = vpop.f32.mrf.mxu0
        %687 = vmatprep.mubr.f32.mxu0 0.0
        %688 = vmatmul.mubr.f32.gmra.mxu0 %v550
        %v689 = vpop.f32.mrf.mxu0
        %v690 = vadd.f32 0.0, %v689
        %v691 = vpop.f32.mrf.mxu0
        %692 = vmatprep.mubr.f32.mxu0 0.0
        %693 = vmatmul.mubr.f32.gmra.mxu0 %v553
        %v694 = vpop.f32.mrf.mxu0
        %v695 = vadd.f32 0.0, %v694
        %v696 = vpop.f32.mrf.mxu0
        %697 = vmatprep.mubr.f32.mxu0 0.0
        %698 = vmatmul.mubr.f32.gmra.mxu0 %v556
        %v699 = vpop.f32.mrf.mxu0
        %v700 = vadd.f32 0.0, %v699
        %v701 = vpop.f32.mrf.mxu0
        %702 = vdwg.mxu0
        %vm703 = vcmask 31744
        %704 = vst.msk [vmem:[%s274] sm:$0xff] %vm703, %v625
        %705 = vst.msk [vmem:[%s274 + $0x8] sm:$0xff] %vm703, %v630
        %706 = vst.msk [vmem:[%s274 + $0x10] sm:$0xff] %vm703, %v635
        %707 = vst.msk [vmem:[%s274 + $0x18] sm:$0xff] %vm703, %v640
        %708 = vst.msk [vmem:[%s274 + $0x20] sm:$0xff] %vm703, %v645
        %709 = vst.msk [vmem:[%s274 + $0x28] sm:$0xff] %vm703, %v650
        %710 = vst.msk [vmem:[%s274 + $0x30] sm:$0xff] %vm703, %v655
        %711 = vst.msk [vmem:[%s274 + $0x38] sm:$0xff] %vm703, %v660
        %712 = vst.msk [vmem:[%s274 + $0x40] sm:$0xff] %vm703, %v665
        %713 = vst.msk [vmem:[%s274 + $0x48] sm:$0xff] %vm703, %v670
        %714 = vst.msk [vmem:[%s274 + $0x50] sm:$0xff] %vm703, %v675
        %715 = vst.msk [vmem:[%s274 + $0x58] sm:$0xff] %vm703, %v680
        %716 = vst.msk [vmem:[%s274 + $0x60] sm:$0xff] %vm703, %v685
        %717 = vst.msk [vmem:[%s274 + $0x68] sm:$0xff] %vm703, %v690
        %718 = vst.msk [vmem:[%s274 + $0x70] sm:$0xff] %vm703, %v695
        %719 = vst.msk [vmem:[%s274 + $0x78] sm:$0xff] %vm703, %v700
        %v720 = vld [vmem:[%s3] sm:$0xff]
        %v721 = vld [vmem:[%s3 + $0x8] sm:$0xff]
        %v722 = vld [vmem:[%s3 + $0x10] sm:$0xff]
        %v723 = vld [vmem:[%s3 + $0x18] sm:$0xff]
        %724 = vxpose.xlu0.b32.start [1/16] %v720, 128
        %725 = vxpose.xlu0.b32.cont [2/16] %v721, 128
        %726 = vxpose.xlu0.b32.cont [3/16] %v722, 128
        %727 = vxpose.xlu0.b32.cont [4/16] %v723, 128
        %728 = vxpose.xlu0.b32.cont [5/16] 0.0, 128
        %729 = vxpose.xlu0.b32.cont [6/16] 0.0, 128
        %730 = vxpose.xlu0.b32.cont [7/16] 0.0, 128
        %731 = vxpose.xlu0.b32.cont [8/16] 0.0, 128
        %732 = vxpose.xlu0.b32.cont [9/16] 0.0, 128
        %733 = vxpose.xlu0.b32.cont [10/16] 0.0, 128
        %734 = vxpose.xlu0.b32.cont [11/16] 0.0, 128
        %735 = vxpose.xlu0.b32.cont [12/16] 0.0, 128
        %736 = vxpose.xlu0.b32.cont [13/16] 0.0, 128
        %737 = vxpose.xlu0.b32.cont [14/16] 0.0, 128
        %738 = vxpose.xlu0.b32.cont [15/16] 0.0, 128
        %739 = vxpose.xlu0.b32.end [16/16] 0.0, 128
        %v740 = vpop.trf.xlu0
        %v741 = vpop.trf.xlu0
        %v742 = vpop.trf.xlu0
        %v743 = vpop.trf.xlu0
        %v744 = vpop.trf.xlu0
        %v745 = vpop.trf.xlu0
        %v746 = vpop.trf.xlu0
        %v747 = vpop.trf.xlu0
        %v748 = vpop.trf.xlu0
        %v749 = vpop.trf.xlu0
        %v750 = vpop.trf.xlu0
        %v751 = vpop.trf.xlu0
        %v752 = vpop.trf.xlu0
        %v753 = vpop.trf.xlu0
        %v754 = vpop.trf.xlu0
        %v755 = vpop.trf.xlu0
        %v757 = vsel %vm328, %v740, 0
        %759 = vmatprep.subr.mxu0 0.0
        %760 = vmatpush1.msra.mxu0 0.0
        %761 = vmatprep.subr.mxu0 0.0
        %762 = vmatpush1.msra.mxu0 0.0
        %763 = vmatprep.subr.mxu0 0.0
        %764 = vmatpush1.msra.mxu0 0.0
        %765 = vmatprep.subr.mxu0 0.0
        %766 = vmatpush1.msra.mxu0 0.0
        %767 = vmatprep.subr.mxu0 0.0
        %768 = vmatpush1.msra.mxu0 0.0
        %769 = vmatprep.subr.mxu0 0.0
        %770 = vmatpush1.msra.mxu0 0.0
        %771 = vmatprep.subr.mxu0 0.0
        %772 = vmatpush1.msra.mxu0 0.0
        %773 = vmatprep.subr.mxu0 0.0
        %774 = vmatpush1.msra.mxu0 0.0
        %775 = vmatprep.subr.mxu0 0.0
        %776 = vmatpush1.msra.mxu0 0.0
        %777 = vmatprep.subr.mxu0 0.0
        %778 = vmatpush1.msra.mxu0 0.0
        %779 = vmatprep.subr.mxu0 0.0
        %780 = vmatpush1.msra.mxu0 0.0
        %781 = vmatprep.subr.mxu0 0.0
        %782 = vmatpush1.msra.mxu0 0.0
        %783 = vmatprep.subr.mxu0 0.0
        %784 = vmatpush1.msra.mxu0 %v471
        %785 = vmatprep.subr.mxu0 0.0
        %786 = vmatpush1.msra.mxu0 %v466
        %787 = vmatprep.subr.mxu0 0.0
        %788 = vmatpush1.msra.mxu0 %v461
        %789 = vmatprep.subr.mxu0 0.0
        %790 = vmatpush1.msra.mxu0 %v456
        %791 = vmatprep.subr.mxu0 0.0
        %792 = vmatpush2.msra.mxu0 0.0
        %793 = vmatprep.subr.mxu0 0.0
        %794 = vmatpush2.msra.mxu0 0.0
        %795 = vmatprep.subr.mxu0 0.0
        %796 = vmatpush2.msra.mxu0 0.0
        %797 = vmatprep.subr.mxu0 0.0
        %798 = vmatpush2.msra.mxu0 0.0
        %799 = vmatprep.subr.mxu0 0.0
        %800 = vmatpush2.msra.mxu0 0.0
        %801 = vmatprep.subr.mxu0 0.0
        %802 = vmatpush2.msra.mxu0 0.0
        %803 = vmatprep.subr.mxu0 0.0
        %804 = vmatpush2.msra.mxu0 0.0
        %805 = vmatprep.subr.mxu0 0.0
        %806 = vmatpush2.msra.mxu0 0.0
        %807 = vmatprep.subr.mxu0 0.0
        %808 = vmatpush2.msra.mxu0 0.0
        %809 = vmatprep.subr.mxu0 0.0
        %810 = vmatpush2.msra.mxu0 0.0
        %811 = vmatprep.subr.mxu0 0.0
        %812 = vmatpush2.msra.mxu0 0.0
        %813 = vmatprep.subr.mxu0 0.0
        %814 = vmatpush2.msra.mxu0 0.0
        %815 = vmatprep.subr.mxu0 0.0
        %816 = vmatpush2.msra.mxu0 0.0
        %817 = vmatprep.subr.mxu0 0.0
        %818 = vmatpush2.msra.mxu0 0.0
        %819 = vmatprep.subr.mxu0 0.0
        %820 = vmatpush2.msra.mxu0 0.0
        %821 = vmatprep.subr.mxu0 0.0
        %822 = vmatpush2.msra.mxu0 0.0
        %823 = vmatprep.mubr.f32.mxu0 0.0
        %824 = vmatmul.mubr.f32.gmra.mxu0 %v757
        %v825 = vpop.f32.mrf.mxu0
        %v826 = vadd.f32 0.0, %v825
        %v827 = vpop.f32.mrf.mxu0
        %828 = vdwg.mxu0
        %829 = vst [vmem:[%s263] sm:$0xf] %v826
        %830 = vst [vmem:[%s249] sm:$0xff] %v456
        %831 = vst [vmem:[%s249 + $0x8] sm:$0xff] %v461
        %832 = vst [vmem:[%s249 + $0x10] sm:$0xff] %v466
        %833 = vst [vmem:[%s249 + $0x18] sm:$0xff] %v471
        %s834 = sand.u32 %s121, 1
        %s835 = scalar_lea.sflag [#allocation3], %s834
        %s836 = sand.u32 %s121, 1
        %s837 = smul.addr %s836, 32
        %s838 = scalar_lea.vmem [#allocation2], %s837
        %s839 = smul.u32 16, %s24
        %p840 = scmp.lt.s32.totalorder %s839, 31
        %s841 = scalar_select %p840, %s839, 31
        %s842 = smul.addr %s841, 8
        %s843 = scalar_lea.vmem %s5, %s842
        %s844 = sand.u32 %s173, 1
        %s845 = scalar_lea.sflag [#allocation5], %s844
        %s846 = sand.u32 %s173, 1
        %s847 = smul.addr %s846, 4
        %s848 = scalar_lea.vmem [#allocation4], %s847
        // Predicated region
        $region37: #{tpu_custom_call.1} parent=35 // pred_check
          %p849 = pneg %p131
        $region38: #{tpu_custom_call.1} parent=35 // pred_check_branch
          %851 = sbr.rel (%p849) target = $region40
        $region39: #{tpu_custom_call.1} parent=35 // pred_region
          %s853 = ssub.s32 512, 512
          %854 = vsyncadd %s835, %s853
          %s855 = smul.addr %s24, 128
          %s856 = scalar_lea.hbm %s4, %s855
          %s857 = sshll.u32 %s838, 4
          %s858 = int_to_ptr.vmem [resolvable:$true] %s857
          %863 = dma.vmem_to_hbm [thread:$0]  %s858, 512, %s856, %s835, 128, 256, 8
        $region40: #{tpu_custom_call.1} parent=35 // pred_fallthru
          _
        // Predicated region
        $region41: #{tpu_custom_call.1} parent=35 // pred_check
          %p864 = pneg %p157
        $region42: #{tpu_custom_call.1} parent=35 // pred_check_branch
          %866 = sbr.rel (%p864) target = $region44
        $region43: #{tpu_custom_call.1} parent=35 // pred_region
          %s867 = smul.u32 16, %s24
        $region44: #{tpu_custom_call.1} parent=35 // pred_fallthru
          _
        // Predicated region
        $region45: #{tpu_custom_call.1} parent=35 // pred_check
          %p868 = pneg %p183
        $region46: #{tpu_custom_call.1} parent=35 // pred_check_branch
          %870 = sbr.rel (%p868) target = $region48
        $region47: #{tpu_custom_call.1} parent=35 // pred_region
          %s872 = ssub.s32 64, 64
          %873 = vsyncadd %s845, %s872
          %s874 = smul.addr %s24, 64
          %s875 = scalar_lea.hbm %s6, %s874
          %s877 = sshll.u32 %s848, 4
          %s878 = int_to_ptr.vmem [resolvable:$true] %s877
          %880 = dma.vmem_to_hbm [thread:$0]  %s878, 64, %s875, %s845
        $region48: #{tpu_custom_call.1} parent=35 // pred_fallthru
          _
      $region36: #{tpu_custom_call.1} parent=5 // pred_fallthru
        _
      %p881 = scmp.le.s32.totalorder 2, %s19
      // Predicated region
      $region49: #{tpu_custom_call.1} parent=5 // pred_check
        %p882 = pneg %p881
      $region50: #{tpu_custom_call.1} parent=5 // pred_check_branch
        %884 = sbr.rel (%p882) target = $region52
      $region51: #{tpu_custom_call.1} parent=5 // pred_region
        %s885 = ssub.s32 %s19, 2
        // Predicated region
        $region53: #{tpu_custom_call.1} parent=51 // pred_check
          %p886 = pneg %p137
        $region54: #{tpu_custom_call.1} parent=51 // pred_check_branch
          %888 = sbr.rel (%p886) target = $region56
        $region55: #{tpu_custom_call.1} parent=51 // pred_region
          %s889 = sand.u32 %s122, 1
          %s890 = scalar_lea.sflag [#allocation3], %s889
          %s891 = sand.u32 %s122, 1
          %s892 = smul.addr %s891, 32
          %s893 = scalar_lea.vmem [#allocation2], %s892
          %894 = dma.done %s890, 512
        $region56: #{tpu_custom_call.1} parent=51 // pred_fallthru
          _
        // Predicated region
        $region57: #{tpu_custom_call.1} parent=51 // pred_check
          %p895 = pneg %p163
        $region58: #{tpu_custom_call.1} parent=51 // pred_check_branch
          %897 = sbr.rel (%p895) target = $region60
        $region59: #{tpu_custom_call.1} parent=51 // pred_region
          %s898 = smul.u32 16, %s25
          %p899 = scmp.lt.s32.totalorder %s898, 31
          %s900 = scalar_select %p899, %s898, 31
          %s901 = smul.addr %s900, 8
          %s902 = scalar_lea.vmem %s5, %s901
        $region60: #{tpu_custom_call.1} parent=51 // pred_fallthru
          _
        // Predicated region
        $region61: #{tpu_custom_call.1} parent=51 // pred_check
          %p903 = pneg %p189
        $region62: #{tpu_custom_call.1} parent=51 // pred_check_branch
          %905 = sbr.rel (%p903) target = $region64
        $region63: #{tpu_custom_call.1} parent=51 // pred_region
          %s906 = sand.u32 %s174, 1
          %s907 = scalar_lea.sflag [#allocation5], %s906
          %s908 = sand.u32 %s174, 1
          %s909 = smul.addr %s908, 4
          %s910 = scalar_lea.vmem [#allocation4], %s909
          %911 = dma.done %s907, 64
        $region64: #{tpu_custom_call.1} parent=51 // pred_fallthru
          _
      $region52: #{tpu_custom_call.1} parent=5 // pred_fallthru
        _
    $region6: #{tpu_custom_call.1} parent=1 // loop_footer
      %s23 = sadd.s32 1, %s19
    $region7: #{tpu_custom_call.1} parent=1 // loop_footer_branch
      %18 = sbr.rel target = $region3
    $region8: #{tpu_custom_call.1} parent=1 // loop_exit
      _
    %912 = vsyncpa [#allocation3], 1
    %s913 = scalar_lea.sflag [#allocation3], 1
    %914 = vsyncpa %s913, 1
    %915 = vsyncpa [#allocation5], 1
    %s916 = scalar_lea.sflag [#allocation5], 1
    %917 = vsyncpa %s916, 1

</llo_original>
